<compile_context>
chip_gen: v6e
topology: v6e:2x2x1
jax: 0.10.0
libtpu: 0.0.40
codegen_flags: <defaults>
</compile_context>

<pallas_src>
import functools

import jax
import jax.numpy as jnp
from jax.experimental import pallas as pl
from jax.experimental.pallas import tpu as pltpu

_LANE_CANDIDATES = (2048, 1024, 512, 256, 128)   # lane-dense widths (multiples of 128)
_SMALL_FAST_PATH_BYTES = 1 << 20                 # below ~1 MiB: skip pallas_call
_MIN_GRID_STEPS = 4                              # keep >=4 blocks when possible


@functools.lru_cache(maxsize=None)
def _chip_config():
    """Per-generation (target_block_bytes, vmem_limit_bytes), queried at trace time."""
    kind = ""
    try:
        kind = jax.devices()[0].device_kind.lower()
    except Exception:
        pass
    vmem_phys = None
    try:
        vmem_phys = int(pltpu.get_tpu_info().vmem_capacity_bytes)
    except Exception:
        pass

    if "v7" in kind:
        block_bytes, vmem_limit = 6 << 20, 40 << 20   # ~3.2 TB/s HBM, 64 MiB physical VMEM
    elif "v6" in kind:
        block_bytes, vmem_limit = 4 << 20, 28 << 20   # ~1.4 TB/s HBM, 128 MiB physical VMEM
    elif "v5" in kind:
        block_bytes, vmem_limit = 2 << 20, 14 << 20   # ~0.82 TB/s HBM, 16 MiB scoped default
    else:
        block_bytes, vmem_limit = 2 << 20, 14 << 20   # conservative default

    if vmem_phys:
        # Keep the scoped-VMEM request clear of physical VMEM, and guarantee that
        # 4 double-buffered tiles (+ slack) fit under the requested limit.
        vmem_limit = min(vmem_limit, (vmem_phys * 3) // 4)
        block_bytes = min(block_bytes, max(1 << 20, vmem_limit // 6))
    return block_bytes, vmem_limit


def _relu_kernel(x_ref, o_ref):
    # Elementwise ReLU on the current VMEM tile (VPU only; DMA/HBM binds).
    o_ref[...] = jnp.maximum(x_ref[...], 0)


def _relu_2d_tiled(flat: jax.Array) -> jax.Array:
    """ReLU over a flat array whose length is a multiple of 128 (no extra copies)."""
    n = flat.shape[0]
    dtype = flat.dtype
    itemsize = jnp.dtype(dtype).itemsize
    target_block_bytes, vmem_limit = _chip_config()

    # Widest lane-dense width that divides n (always hits 128 by precondition).
    for lanes in _LANE_CANDIDATES:
        if n % lanes == 0:
            break
    rows = n // lanes

    # dtype-aware minimum sublane count (f32: 8, bf16: 16, int8/fp8: 32).
    min_rows = {4: 8, 2: 16, 1: 32}.get(itemsize, 8)

    # Generation-sized blocks, rounded down to a multiple of min_rows.
    block_rows = max(
        min_rows,
        (target_block_bytes // (lanes * itemsize)) // min_rows * min_rows,
    )
    # Keep >= _MIN_GRID_STEPS grid steps when the tensor allows it, so the
    # "parallel" row axis actually shards across v7x's two TensorCores and the
    # output writeback of block i-1 overlaps the prefetch of block i+1.
    if rows >= _MIN_GRID_STEPS * min_rows:
        cap = max(min_rows, (rows // _MIN_GRID_STEPS) // min_rows * min_rows)
        block_rows = min(block_rows, cap)
    block_rows = min(block_rows, rows)

    x2d = flat.reshape(rows, lanes)            # copy-free view
    grid = (pl.cdiv(rows, block_rows),)        # partial last block is masked by Pallas

    out2d = pl.pallas_call(
        _relu_kernel,
        out_shape=jax.ShapeDtypeStruct((rows, lanes), dtype),
        grid=grid,
        in_specs=[pl.BlockSpec((block_rows, lanes), lambda i: (i, 0))],
        out_specs=pl.BlockSpec((block_rows, lanes), lambda i: (i, 0)),
        compiler_params=pltpu.CompilerParams(
            # Parallel row axis: shards across v7x's 2 TensorCores, neutral on v5e/v6e.
            dimension_semantics=("parallel",),
            vmem_limit_bytes=vmem_limit,
        ),
    )(x2d)
    return out2d.reshape(n)


def rectify(feature_map: jax.Array) -> jax.Array:
    """ReLU correction: remove negative values. Preserves shape & dtype."""
    orig_shape = feature_map.shape
    n = feature_map.size
    if n == 0:
        return feature_map

    nbytes = n * jnp.dtype(feature_map.dtype).itemsize
    if n % 128 != 0 or nbytes < _SMALL_FAST_PATH_BYTES:
        # Small or ragged tensors: plain XLA elementwise ReLU.  No pallas_call
        # launch boundary, fusable with producers/consumers, and avoids the
        # 3x-traffic pad -> kernel -> slice fallback.  Exact and dtype-preserving.
        return jnp.maximum(feature_map, 0)

    out_flat = _relu_2d_tiled(feature_map.reshape(-1))  # copy-free flatten
    return out_flat.reshape(orig_shape)


if __name__ == "__main__":
    key = jax.random.PRNGKey(0)
    k0, k1, k2, k3 = jax.random.split(key, 4)

    # Primary small NCHW feature map (fast path).
    x = jax.random.normal(k0, (2, 4, 16, 16), dtype=jnp.float32)
    y = rectify(x)
    jax.block_until_ready(y)
    assert y.shape == x.shape and y.dtype == x.dtype
    assert jnp.allclose(y, jnp.maximum(x, 0.0)), "ReLU mismatch (f32 small)"

    # Moderate feature map (4 MiB): exercises the Pallas multi-step parallel grid.
    xb = jax.random.normal(k1, (4, 16, 128, 128), dtype=jnp.float32)
    yb = rectify(xb)
    jax.block_until_ready(yb)
    assert yb.shape == xb.shape and yb.dtype == xb.dtype
    assert jnp.allclose(yb, jnp.maximum(xb, 0.0)), "Pallas ReLU mismatch (f32)"

    # Ragged element count (not a multiple of 128) -> plain fast path.
    xr = jax.random.normal(k2, (2, 3, 5, 7), dtype=jnp.float32)
    yr = rectify(xr)
    jax.block_until_ready(yr)
    assert jnp.allclose(yr, jnp.maximum(xr, 0.0)), "ReLU mismatch (ragged)"

    # bf16 feature map (1 MiB): exercises Pallas path with dtype-aware sublanes.
    xh = jax.random.normal(k3, (2, 16, 128, 128), dtype=jnp.bfloat16)
    yh = rectify(xh)
    jax.block_until_ready(yh)
    assert yh.dtype == jnp.bfloat16
    assert jnp.allclose(
        yh.astype(jnp.float32), jnp.maximum(xh.astype(jnp.float32), 0.0)
    ), "Pallas ReLU mismatch (bf16)"

    print("KERNEL_OK")
</pallas_src>

<mosaic_0001>
module attributes {stable_mosaic.version = 11 : i64} {
  func.func @_relu_kernel(%arg0: i32, %arg1: memref<128x2048xf32, #tpu.memory_space<vmem>>, %arg2: memref<128x2048xf32, #tpu.memory_space<vmem>>) attributes {dimension_semantics = [#tpu.dimension_semantics<parallel>], iteration_bounds = array<i64: 4>, scalar_prefetch = 0 : i64, scratch_operands = 0 : i64, tpu.core_type = #tpu.core_type<tc>, window_params = [{transform_indices = @transform_0, window_bounds = array<i64: 128, 2048>}, {transform_indices = @transform_1, window_bounds = array<i64: 128, 2048>}]} {
    %c0 = arith.constant 0 : index
    %c0_0 = arith.constant 0 : index
    %0 = vector.load %arg1[%c0, %c0_0] : memref<128x2048xf32, #tpu.memory_space<vmem>>, vector<128x2048xf32>
    %cst = arith.constant 0.000000e+00 : f32
    %1 = vector.broadcast %cst : f32 to vector<128x2048xf32>
    %2 = arith.maximumf %0, %1 : vector<128x2048xf32>
    %c0_1 = arith.constant 0 : index
    %c0_2 = arith.constant 0 : index
    %3 = vector.load %arg2[%c0_1, %c0_2] : memref<128x2048xf32, #tpu.memory_space<vmem>>, vector<128x2048xf32>
    tpu.vector_store %arg2[%c0_1, %c0_2], %2 {strides = array<i32>} : memref<128x2048xf32, #tpu.memory_space<vmem>>, vector<128x2048xf32>,
    return
  }
  func.func @transform_0(%arg0: i32) -> (i32, i32) {
    %c0_i32 = arith.constant 0 : i32
    %c0_i32_0 = arith.constant 0 : i32
    return %arg0, %c0_i32 : i32, i32
  }
  func.func @transform_1(%arg0: i32) -> (i32, i32) {
    %c0_i32 = arith.constant 0 : i32
    %c0_i32_0 = arith.constant 0 : i32
    return %arg0, %c0_i32 : i32, i32
  }
}

</mosaic_0001>

<llo_original>
// kernel: tpu_custom_call.1
$region0: #{tpu_custom_call.1}
  #allocation0 [shape = 'u32[]', space=smem, size = 0x4, offset = 0x4, fixed_abs, tag = 'smem constant byte address 0x4 - core index']
  #allocation1 [shape = 'u32[144,128]{1,0:T(1,128)}', space=vmem, size = 0x12000, scoped, tag = 'internal scratch']
  %s0 = inlined_call_operand.hbm [shape: f32[512,2048], index: 0, kind: input, shape index: {}]
  %s1 = inlined_call_operand.hbm [shape: f32[512,2048], index: 1, kind: output, shape index: {}]
  %s2 = sld [smem:[#allocation0]]
  $region41: #{tpu_custom_call.1} parent=0
    _
  %s4 = ssub.s32 1, %s2
  %s5 = scalar_select 0, %s4, %s2
  $region1: #{tpu_custom_call.1} parent=0
    #allocation2 [shape = 'u8[2097152]{0}', space=vmem, size = 0x200000, scoped, tag = 'input window, operand 0']
    #allocation3 [shape = 's32[2]{0}', space=sflag, size = 0x8, scoped, tag = 'scoped memory for tpu_custom_call.1']
    #allocation4 [shape = 's32[2]{0}', space=sflag, size = 0x8, scoped, tag = 'scoped memory for tpu_custom_call.1']
    #allocation5 [shape = 'u8[2097152]{0}', space=vmem, size = 0x200000, scoped, tag = 'output window, operand 0']
    %6 = vsyncpa [#allocation3], 0
    %s7 = scalar_lea.sflag [#allocation3], 1
    %8 = vsyncpa %s7, 0
    %9 = vsyncpa [#allocation4], 0
    %s10 = scalar_lea.sflag [#allocation4], 1
    %11 = vsyncpa %s10, 0
    loop: start=0, step=1, limit=6
    $region2: #{tpu_custom_call.1} parent=1 // loop_pre_header
      _
    $region3: #{tpu_custom_call.1} parent=1 // loop_header
      %s13 = sphi 0, %s17
      %p14 = scmp.ge.s32.totalorder %s13, 6
      %s23 = sphi 0, %s25
      %s26 = sphi 0, %s23
      %s27 = sphi 0, %s26
      %s43 = sphi 0, %s27
      %s49 = sphi 0, %s51
      %s52 = sphi 0, %s49
      %s53 = sphi 0, %s52
      %s69 = sphi 0, %s53
    $region4: #{tpu_custom_call.1} parent=1 // loop_header_branch
      %16 = sbr.rel (%p14) target = $region8
    $region5: #{tpu_custom_call.1} parent=1 // loop_body
      %s18 = ssub.s32 %s13, 1
      %s19 = ssub.s32 %s13, 2
      %s20 = sadd.s32 %s13, 1
      %s21 = ssub.s32 %s13, %s20
      %p22 = scmp.eq.s32.totalorder %s21, 0
      %s24 = sadd.s32 %s23, 1
      %s25 = scalar_select %p22, %s23, %s24
      %p28 = pneg %p22
      %p29 = scmp.eq.s32.totalorder %s13, 3
      %p30 = por %p28, %p29
      %p31 = scmp.ne.s32.totalorder %s23, %s26
      %p32 = scmp.eq.s32.totalorder %s13, 0
      %p33 = por %p31, %p32
      %p34 = scmp.ne.s32.totalorder %s23, %s26
      %p35 = scmp.eq.s32.totalorder %s18, 3
      %p36 = por %p34, %p35
      %p37 = scmp.ne.s32.totalorder %s26, %s27
      %p38 = scmp.eq.s32.totalorder %s18, 0
      %p39 = por %p37, %p38
      %p40 = scmp.ne.s32.totalorder %s26, %s27
      %p41 = scmp.eq.s32.totalorder %s19, 3
      %p42 = por %p40, %p41
      %p44 = scmp.ne.s32.totalorder %s27, %s43
      %p45 = scmp.eq.s32.totalorder %s19, 0
      %p46 = por %p44, %p45
      %s47 = ssub.s32 %s13, %s20
      %p48 = scmp.eq.s32.totalorder %s47, 0
      %s50 = sadd.s32 %s49, 1
      %s51 = scalar_select %p48, %s49, %s50
      %p54 = pneg %p48
      %p55 = scmp.eq.s32.totalorder %s13, 3
      %p56 = por %p54, %p55
      %p57 = scmp.ne.s32.totalorder %s49, %s52
      %p58 = scmp.eq.s32.totalorder %s13, 0
      %p59 = por %p57, %p58
      %p60 = scmp.ne.s32.totalorder %s49, %s52
      %p61 = scmp.eq.s32.totalorder %s18, 3
      %p62 = por %p60, %p61
      %p63 = scmp.ne.s32.totalorder %s52, %s53
      %p64 = scmp.eq.s32.totalorder %s18, 0
      %p65 = por %p63, %p64
      %p66 = scmp.ne.s32.totalorder %s52, %s53
      %p67 = scmp.eq.s32.totalorder %s19, 3
      %p68 = por %p66, %p67
      %p70 = scmp.ne.s32.totalorder %s53, %s69
      %p71 = scmp.eq.s32.totalorder %s19, 0
      %p72 = por %p70, %p71
      %p73 = scmp.le.s32.totalorder 1, %s13
      %p74 = scmp.lt.s32.totalorder %s13, 5
      %p75 = pnand %p73, %p74
      %p76 = pneg %p75
      // Predicated region
      $region9: #{tpu_custom_call.1} parent=5 // pred_check
        _
      $region10: #{tpu_custom_call.1} parent=5 // pred_check_branch
        %78 = sbr.rel (%p75) target = $region12
      $region11: #{tpu_custom_call.1} parent=5 // pred_region
        %s79 = ssub.s32 %s13, 1
      $region12: #{tpu_custom_call.1} parent=5 // pred_fallthru
        _
      %p80 = scmp.lt.s32.totalorder %s13, 4
      // Predicated region
      $region13: #{tpu_custom_call.1} parent=5 // pred_check
        %p81 = pneg %p80
      $region14: #{tpu_custom_call.1} parent=5 // pred_check_branch
        %83 = sbr.rel (%p81) target = $region16
      $region15: #{tpu_custom_call.1} parent=5 // pred_region
        // Predicated region
        $region17: #{tpu_custom_call.1} parent=15 // pred_check
          %p84 = pneg %p33
        $region18: #{tpu_custom_call.1} parent=15 // pred_check_branch
          %86 = sbr.rel (%p84) target = $region20
        $region19: #{tpu_custom_call.1} parent=15 // pred_region
          %s87 = sand.u32 %s23, 1
          %s88 = scalar_lea.sflag [#allocation3], %s87
          %s89 = sand.u32 %s23, 1
          %s90 = smul.addr %s89, 2048
          %s91 = scalar_lea.vmem [#allocation2], %s90
          %s92 = smul.u32 16, %s13
          %s94 = ssub.s32 32768, 32768
          %95 = vsyncadd %s88, %s94
          %s96 = smul.addr %s92, 16
          %s97 = smul.addr %s96, 128
          %s98 = scalar_lea.hbm %s0, %s97
          %s99 = sshll.u32 %s91, 4
          %s100 = int_to_ptr.vmem [resolvable:$true] %s99
          %105 = dma.hbm_to_vmem [thread:$0]  %s98, 32768, %s100, %s88, 2048, 2048, 128
        $region20: #{tpu_custom_call.1} parent=15 // pred_fallthru
          _
      $region16: #{tpu_custom_call.1} parent=5 // pred_fallthru
        _
      %p106 = scmp.le.s32.totalorder 1, %s13
      %p107 = scmp.lt.s32.totalorder %s13, 5
      %p108 = pnand %p106, %p107
      %p109 = pneg %p108
      // Predicated region
      $region21: #{tpu_custom_call.1} parent=5 // pred_check
        _
      $region22: #{tpu_custom_call.1} parent=5 // pred_check_branch
        %111 = sbr.rel (%p108) target = $region24
      $region23: #{tpu_custom_call.1} parent=5 // pred_region
        %s112 = ssub.s32 %s13, 1
        %s113 = sand.u32 %s26, 1
        %s114 = scalar_lea.sflag [#allocation3], %s113
        %s115 = sand.u32 %s26, 1
        %s116 = smul.addr %s115, 2048
        %s117 = scalar_lea.vmem [#allocation2], %s116
        // Predicated region
        $region25: #{tpu_custom_call.1} parent=23 // pred_check
          %p118 = pneg %p39
        $region26: #{tpu_custom_call.1} parent=23 // pred_check_branch
          %120 = sbr.rel (%p118) target = $region28
        $region27: #{tpu_custom_call.1} parent=23 // pred_region
          %121 = dma.done %s114, 32768
        $region28: #{tpu_custom_call.1} parent=23 // pred_fallthru
          _
        %s122 = sand.u32 %s26, 1
        %s123 = scalar_lea.sflag [#allocation3], %s122
        %s124 = sand.u32 %s26, 1
        %s125 = smul.addr %s124, 2048
        %s126 = scalar_lea.vmem [#allocation2], %s125
        %p127 = pneg %p39
        %p128 = pneg %p36
        %p129 = pneg %p65
        %p130 = pneg %p62
        %s131 = sand.u32 %s52, 1
        %s132 = scalar_lea.sflag [#allocation4], %s131
        %s133 = sand.u32 %s52, 1
        %s134 = smul.addr %s133, 2048
        %s135 = scalar_lea.vmem [#allocation5], %s134
        %s136 = smul.u32 16, %s18
        %s137 = smul.u32 16, %s18
        %v138 = vld [vmem:[%s117] sm:$0xff]
        %v139 = vld [vmem:[%s117 + $0x8] sm:$0xff]
        %v140 = vld [vmem:[%s117 + $0x10] sm:$0xff]
        %v141 = vld [vmem:[%s117 + $0x18] sm:$0xff]
        %v142 = vld [vmem:[%s117 + $0x20] sm:$0xff]
        %v143 = vld [vmem:[%s117 + $0x28] sm:$0xff]
        %v144 = vld [vmem:[%s117 + $0x30] sm:$0xff]
        %v145 = vld [vmem:[%s117 + $0x38] sm:$0xff]
        %v146 = vld [vmem:[%s117 + $0x40] sm:$0xff]
        %v147 = vld [vmem:[%s117 + $0x48] sm:$0xff]
        %v148 = vld [vmem:[%s117 + $0x50] sm:$0xff]
        %v149 = vld [vmem:[%s117 + $0x58] sm:$0xff]
        %v150 = vld [vmem:[%s117 + $0x60] sm:$0xff]
        %v151 = vld [vmem:[%s117 + $0x68] sm:$0xff]
        %v152 = vld [vmem:[%s117 + $0x70] sm:$0xff]
        %v153 = vld [vmem:[%s117 + $0x78] sm:$0xff]
        %v154 = vld [vmem:[%s117 + $0x80] sm:$0xff]
        %v155 = vld [vmem:[%s117 + $0x88] sm:$0xff]
        %v156 = vld [vmem:[%s117 + $0x90] sm:$0xff]
        %v157 = vld [vmem:[%s117 + $0x98] sm:$0xff]
        %v158 = vld [vmem:[%s117 + $0xa0] sm:$0xff]
        %v159 = vld [vmem:[%s117 + $0xa8] sm:$0xff]
        %v160 = vld [vmem:[%s117 + $0xb0] sm:$0xff]
        %v161 = vld [vmem:[%s117 + $0xb8] sm:$0xff]
        %v162 = vld [vmem:[%s117 + $0xc0] sm:$0xff]
        %v163 = vld [vmem:[%s117 + $0xc8] sm:$0xff]
        %v164 = vld [vmem:[%s117 + $0xd0] sm:$0xff]
        %v165 = vld [vmem:[%s117 + $0xd8] sm:$0xff]
        %v166 = vld [vmem:[%s117 + $0xe0] sm:$0xff]
        %v167 = vld [vmem:[%s117 + $0xe8] sm:$0xff]
        %v168 = vld [vmem:[%s117 + $0xf0] sm:$0xff]
        %v169 = vld [vmem:[%s117 + $0xf8] sm:$0xff]
        %v170 = vld [vmem:[%s117 + $0x100] sm:$0xff]
        %v171 = vld [vmem:[%s117 + $0x108] sm:$0xff]
        %v172 = vld [vmem:[%s117 + $0x110] sm:$0xff]
        %v173 = vld [vmem:[%s117 + $0x118] sm:$0xff]
        %v174 = vld [vmem:[%s117 + $0x120] sm:$0xff]
        %v175 = vld [vmem:[%s117 + $0x128] sm:$0xff]
        %v176 = vld [vmem:[%s117 + $0x130] sm:$0xff]
        %v177 = vld [vmem:[%s117 + $0x138] sm:$0xff]
        %v178 = vld [vmem:[%s117 + $0x140] sm:$0xff]
        %v179 = vld [vmem:[%s117 + $0x148] sm:$0xff]
        %v180 = vld [vmem:[%s117 + $0x150] sm:$0xff]
        %v181 = vld [vmem:[%s117 + $0x158] sm:$0xff]
        %v182 = vld [vmem:[%s117 + $0x160] sm:$0xff]
        %v183 = vld [vmem:[%s117 + $0x168] sm:$0xff]
        %v184 = vld [vmem:[%s117 + $0x170] sm:$0xff]
        %v185 = vld [vmem:[%s117 + $0x178] sm:$0xff]
        %v186 = vld [vmem:[%s117 + $0x180] sm:$0xff]
        %v187 = vld [vmem:[%s117 + $0x188] sm:$0xff]
        %v188 = vld [vmem:[%s117 + $0x190] sm:$0xff]
        %v189 = vld [vmem:[%s117 + $0x198] sm:$0xff]
        %v190 = vld [vmem:[%s117 + $0x1a0] sm:$0xff]
        %v191 = vld [vmem:[%s117 + $0x1a8] sm:$0xff]
        %v192 = vld [vmem:[%s117 + $0x1b0] sm:$0xff]
        %v193 = vld [vmem:[%s117 + $0x1b8] sm:$0xff]
        %v194 = vld [vmem:[%s117 + $0x1c0] sm:$0xff]
        %v195 = vld [vmem:[%s117 + $0x1c8] sm:$0xff]
        %v196 = vld [vmem:[%s117 + $0x1d0] sm:$0xff]
        %v197 = vld [vmem:[%s117 + $0x1d8] sm:$0xff]
        %v198 = vld [vmem:[%s117 + $0x1e0] sm:$0xff]
        %v199 = vld [vmem:[%s117 + $0x1e8] sm:$0xff]
        %v200 = vld [vmem:[%s117 + $0x1f0] sm:$0xff]
        %v201 = vld [vmem:[%s117 + $0x1f8] sm:$0xff]
        %v202 = vld [vmem:[%s117 + $0x200] sm:$0xff]
        %v203 = vld [vmem:[%s117 + $0x208] sm:$0xff]
        %v204 = vld [vmem:[%s117 + $0x210] sm:$0xff]
        %v205 = vld [vmem:[%s117 + $0x218] sm:$0xff]
        %v206 = vld [vmem:[%s117 + $0x220] sm:$0xff]
        %v207 = vld [vmem:[%s117 + $0x228] sm:$0xff]
        %v208 = vld [vmem:[%s117 + $0x230] sm:$0xff]
        %v209 = vld [vmem:[%s117 + $0x238] sm:$0xff]
        %v210 = vld [vmem:[%s117 + $0x240] sm:$0xff]
        %v211 = vld [vmem:[%s117 + $0x248] sm:$0xff]
        %v212 = vld [vmem:[%s117 + $0x250] sm:$0xff]
        %v213 = vld [vmem:[%s117 + $0x258] sm:$0xff]
        %v214 = vld [vmem:[%s117 + $0x260] sm:$0xff]
        %v215 = vld [vmem:[%s117 + $0x268] sm:$0xff]
        %v216 = vld [vmem:[%s117 + $0x270] sm:$0xff]
        %v217 = vld [vmem:[%s117 + $0x278] sm:$0xff]
        %v218 = vld [vmem:[%s117 + $0x280] sm:$0xff]
        %v219 = vld [vmem:[%s117 + $0x288] sm:$0xff]
        %v220 = vld [vmem:[%s117 + $0x290] sm:$0xff]
        %v221 = vld [vmem:[%s117 + $0x298] sm:$0xff]
        %v222 = vld [vmem:[%s117 + $0x2a0] sm:$0xff]
        %v223 = vld [vmem:[%s117 + $0x2a8] sm:$0xff]
        %v224 = vld [vmem:[%s117 + $0x2b0] sm:$0xff]
        %v225 = vld [vmem:[%s117 + $0x2b8] sm:$0xff]
        %v226 = vld [vmem:[%s117 + $0x2c0] sm:$0xff]
        %v227 = vld [vmem:[%s117 + $0x2c8] sm:$0xff]
        %v228 = vld [vmem:[%s117 + $0x2d0] sm:$0xff]
        %v229 = vld [vmem:[%s117 + $0x2d8] sm:$0xff]
        %v230 = vld [vmem:[%s117 + $0x2e0] sm:$0xff]
        %v231 = vld [vmem:[%s117 + $0x2e8] sm:$0xff]
        %v232 = vld [vmem:[%s117 + $0x2f0] sm:$0xff]
        %v233 = vld [vmem:[%s117 + $0x2f8] sm:$0xff]
        %v234 = vld [vmem:[%s117 + $0x300] sm:$0xff]
        %v235 = vld [vmem:[%s117 + $0x308] sm:$0xff]
        %v236 = vld [vmem:[%s117 + $0x310] sm:$0xff]
        %v237 = vld [vmem:[%s117 + $0x318] sm:$0xff]
        %v238 = vld [vmem:[%s117 + $0x320] sm:$0xff]
        %v239 = vld [vmem:[%s117 + $0x328] sm:$0xff]
        %v240 = vld [vmem:[%s117 + $0x330] sm:$0xff]
        %v241 = vld [vmem:[%s117 + $0x338] sm:$0xff]
        %v242 = vld [vmem:[%s117 + $0x340] sm:$0xff]
        %v243 = vld [vmem:[%s117 + $0x348] sm:$0xff]
        %v244 = vld [vmem:[%s117 + $0x350] sm:$0xff]
        %v245 = vld [vmem:[%s117 + $0x358] sm:$0xff]
        %v246 = vld [vmem:[%s117 + $0x360] sm:$0xff]
        %v247 = vld [vmem:[%s117 + $0x368] sm:$0xff]
        %v248 = vld [vmem:[%s117 + $0x370] sm:$0xff]
        %v249 = vld [vmem:[%s117 + $0x378] sm:$0xff]
        %v250 = vld [vmem:[%s117 + $0x380] sm:$0xff]
        %v251 = vld [vmem:[%s117 + $0x388] sm:$0xff]
        %v252 = vld [vmem:[%s117 + $0x390] sm:$0xff]
        %v253 = vld [vmem:[%s117 + $0x398] sm:$0xff]
        %v254 = vld [vmem:[%s117 + $0x3a0] sm:$0xff]
        %v255 = vld [vmem:[%s117 + $0x3a8] sm:$0xff]
        %v256 = vld [vmem:[%s117 + $0x3b0] sm:$0xff]
        %v257 = vld [vmem:[%s117 + $0x3b8] sm:$0xff]
        %v258 = vld [vmem:[%s117 + $0x3c0] sm:$0xff]
        %v259 = vld [vmem:[%s117 + $0x3c8] sm:$0xff]
        %v260 = vld [vmem:[%s117 + $0x3d0] sm:$0xff]
        %v261 = vld [vmem:[%s117 + $0x3d8] sm:$0xff]
        %v262 = vld [vmem:[%s117 + $0x3e0] sm:$0xff]
        %v263 = vld [vmem:[%s117 + $0x3e8] sm:$0xff]
        %v264 = vld [vmem:[%s117 + $0x3f0] sm:$0xff]
        %v265 = vld [vmem:[%s117 + $0x3f8] sm:$0xff]
        %v266 = vld [vmem:[%s117 + $0x400] sm:$0xff]
        %v267 = vld [vmem:[%s117 + $0x408] sm:$0xff]
        %v268 = vld [vmem:[%s117 + $0x410] sm:$0xff]
        %v269 = vld [vmem:[%s117 + $0x418] sm:$0xff]
        %v270 = vld [vmem:[%s117 + $0x420] sm:$0xff]
        %v271 = vld [vmem:[%s117 + $0x428] sm:$0xff]
        %v272 = vld [vmem:[%s117 + $0x430] sm:$0xff]
        %v273 = vld [vmem:[%s117 + $0x438] sm:$0xff]
        %v274 = vld [vmem:[%s117 + $0x440] sm:$0xff]
        %v275 = vld [vmem:[%s117 + $0x448] sm:$0xff]
        %v276 = vld [vmem:[%s117 + $0x450] sm:$0xff]
        %v277 = vld [vmem:[%s117 + $0x458] sm:$0xff]
        %v278 = vld [vmem:[%s117 + $0x460] sm:$0xff]
        %v279 = vld [vmem:[%s117 + $0x468] sm:$0xff]
        %v280 = vld [vmem:[%s117 + $0x470] sm:$0xff]
        %v281 = vld [vmem:[%s117 + $0x478] sm:$0xff]
        %v282 = vld [vmem:[%s117 + $0x480] sm:$0xff]
        %v283 = vld [vmem:[%s117 + $0x488] sm:$0xff]
        %v284 = vld [vmem:[%s117 + $0x490] sm:$0xff]
        %v285 = vld [vmem:[%s117 + $0x498] sm:$0xff]
        %v286 = vld [vmem:[%s117 + $0x4a0] sm:$0xff]
        %v287 = vld [vmem:[%s117 + $0x4a8] sm:$0xff]
        %v288 = vld [vmem:[%s117 + $0x4b0] sm:$0xff]
        %v289 = vld [vmem:[%s117 + $0x4b8] sm:$0xff]
        %v290 = vld [vmem:[%s117 + $0x4c0] sm:$0xff]
        %v291 = vld [vmem:[%s117 + $0x4c8] sm:$0xff]
        %v292 = vld [vmem:[%s117 + $0x4d0] sm:$0xff]
        %v293 = vld [vmem:[%s117 + $0x4d8] sm:$0xff]
        %v294 = vld [vmem:[%s117 + $0x4e0] sm:$0xff]
        %v295 = vld [vmem:[%s117 + $0x4e8] sm:$0xff]
        %v296 = vld [vmem:[%s117 + $0x4f0] sm:$0xff]
        %v297 = vld [vmem:[%s117 + $0x4f8] sm:$0xff]
        %v298 = vld [vmem:[%s117 + $0x500] sm:$0xff]
        %v299 = vld [vmem:[%s117 + $0x508] sm:$0xff]
        %v300 = vld [vmem:[%s117 + $0x510] sm:$0xff]
        %v301 = vld [vmem:[%s117 + $0x518] sm:$0xff]
        %v302 = vld [vmem:[%s117 + $0x520] sm:$0xff]
        %v303 = vld [vmem:[%s117 + $0x528] sm:$0xff]
        %v304 = vld [vmem:[%s117 + $0x530] sm:$0xff]
        %v305 = vld [vmem:[%s117 + $0x538] sm:$0xff]
        %v306 = vld [vmem:[%s117 + $0x540] sm:$0xff]
        %v307 = vld [vmem:[%s117 + $0x548] sm:$0xff]
        %v308 = vld [vmem:[%s117 + $0x550] sm:$0xff]
        %v309 = vld [vmem:[%s117 + $0x558] sm:$0xff]
        %v310 = vld [vmem:[%s117 + $0x560] sm:$0xff]
        %v311 = vld [vmem:[%s117 + $0x568] sm:$0xff]
        %v312 = vld [vmem:[%s117 + $0x570] sm:$0xff]
        %v313 = vld [vmem:[%s117 + $0x578] sm:$0xff]
        %v314 = vld [vmem:[%s117 + $0x580] sm:$0xff]
        %v315 = vld [vmem:[%s117 + $0x588] sm:$0xff]
        %v316 = vld [vmem:[%s117 + $0x590] sm:$0xff]
        %v317 = vld [vmem:[%s117 + $0x598] sm:$0xff]
        %v318 = vld [vmem:[%s117 + $0x5a0] sm:$0xff]
        %v319 = vld [vmem:[%s117 + $0x5a8] sm:$0xff]
        %v320 = vld [vmem:[%s117 + $0x5b0] sm:$0xff]
        %v321 = vld [vmem:[%s117 + $0x5b8] sm:$0xff]
        %v322 = vld [vmem:[%s117 + $0x5c0] sm:$0xff]
        %v323 = vld [vmem:[%s117 + $0x5c8] sm:$0xff]
        %v324 = vld [vmem:[%s117 + $0x5d0] sm:$0xff]
        %v325 = vld [vmem:[%s117 + $0x5d8] sm:$0xff]
        %v326 = vld [vmem:[%s117 + $0x5e0] sm:$0xff]
        %v327 = vld [vmem:[%s117 + $0x5e8] sm:$0xff]
        %v328 = vld [vmem:[%s117 + $0x5f0] sm:$0xff]
        %v329 = vld [vmem:[%s117 + $0x5f8] sm:$0xff]
        %v330 = vld [vmem:[%s117 + $0x600] sm:$0xff]
        %v331 = vld [vmem:[%s117 + $0x608] sm:$0xff]
        %v332 = vld [vmem:[%s117 + $0x610] sm:$0xff]
        %v333 = vld [vmem:[%s117 + $0x618] sm:$0xff]
        %v334 = vld [vmem:[%s117 + $0x620] sm:$0xff]
        %v335 = vld [vmem:[%s117 + $0x628] sm:$0xff]
        %v336 = vld [vmem:[%s117 + $0x630] sm:$0xff]
        %v337 = vld [vmem:[%s117 + $0x638] sm:$0xff]
        %v338 = vld [vmem:[%s117 + $0x640] sm:$0xff]
        %v339 = vld [vmem:[%s117 + $0x648] sm:$0xff]
        %v340 = vld [vmem:[%s117 + $0x650] sm:$0xff]
        %v341 = vld [vmem:[%s117 + $0x658] sm:$0xff]
        %v342 = vld [vmem:[%s117 + $0x660] sm:$0xff]
        %v343 = vld [vmem:[%s117 + $0x668] sm:$0xff]
        %v344 = vld [vmem:[%s117 + $0x670] sm:$0xff]
        %v345 = vld [vmem:[%s117 + $0x678] sm:$0xff]
        %v346 = vld [vmem:[%s117 + $0x680] sm:$0xff]
        %v347 = vld [vmem:[%s117 + $0x688] sm:$0xff]
        %v348 = vld [vmem:[%s117 + $0x690] sm:$0xff]
        %v349 = vld [vmem:[%s117 + $0x698] sm:$0xff]
        %v350 = vld [vmem:[%s117 + $0x6a0] sm:$0xff]
        %v351 = vld [vmem:[%s117 + $0x6a8] sm:$0xff]
        %v352 = vld [vmem:[%s117 + $0x6b0] sm:$0xff]
        %v353 = vld [vmem:[%s117 + $0x6b8] sm:$0xff]
        %v354 = vld [vmem:[%s117 + $0x6c0] sm:$0xff]
        %v355 = vld [vmem:[%s117 + $0x6c8] sm:$0xff]
        %v356 = vld [vmem:[%s117 + $0x6d0] sm:$0xff]
        %v357 = vld [vmem:[%s117 + $0x6d8] sm:$0xff]
        %v358 = vld [vmem:[%s117 + $0x6e0] sm:$0xff]
        %v359 = vld [vmem:[%s117 + $0x6e8] sm:$0xff]
        %v360 = vld [vmem:[%s117 + $0x6f0] sm:$0xff]
        %v361 = vld [vmem:[%s117 + $0x6f8] sm:$0xff]
        %v362 = vld [vmem:[%s117 + $0x700] sm:$0xff]
        %v363 = vld [vmem:[%s117 + $0x708] sm:$0xff]
        %v364 = vld [vmem:[%s117 + $0x710] sm:$0xff]
        %v365 = vld [vmem:[%s117 + $0x718] sm:$0xff]
        %v366 = vld [vmem:[%s117 + $0x720] sm:$0xff]
        %v367 = vld [vmem:[%s117 + $0x728] sm:$0xff]
        %v368 = vld [vmem:[%s117 + $0x730] sm:$0xff]
        %v369 = vld [vmem:[%s117 + $0x738] sm:$0xff]
        %v370 = vld [vmem:[%s117 + $0x740] sm:$0xff]
        %v371 = vld [vmem:[%s117 + $0x748] sm:$0xff]
        %v372 = vld [vmem:[%s117 + $0x750] sm:$0xff]
        %v373 = vld [vmem:[%s117 + $0x758] sm:$0xff]
        %v374 = vld [vmem:[%s117 + $0x760] sm:$0xff]
        %v375 = vld [vmem:[%s117 + $0x768] sm:$0xff]
        %v376 = vld [vmem:[%s117 + $0x770] sm:$0xff]
        %v377 = vld [vmem:[%s117 + $0x778] sm:$0xff]
        %v378 = vld [vmem:[%s117 + $0x780] sm:$0xff]
        %v379 = vld [vmem:[%s117 + $0x788] sm:$0xff]
        %v380 = vld [vmem:[%s117 + $0x790] sm:$0xff]
        %v381 = vld [vmem:[%s117 + $0x798] sm:$0xff]
        %v382 = vld [vmem:[%s117 + $0x7a0] sm:$0xff]
        %v383 = vld [vmem:[%s117 + $0x7a8] sm:$0xff]
        %v384 = vld [vmem:[%s117 + $0x7b0] sm:$0xff]
        %v385 = vld [vmem:[%s117 + $0x7b8] sm:$0xff]
        %v386 = vld [vmem:[%s117 + $0x7c0] sm:$0xff]
        %v387 = vld [vmem:[%s117 + $0x7c8] sm:$0xff]
        %v388 = vld [vmem:[%s117 + $0x7d0] sm:$0xff]
        %v389 = vld [vmem:[%s117 + $0x7d8] sm:$0xff]
        %v390 = vld [vmem:[%s117 + $0x7e0] sm:$0xff]
        %v391 = vld [vmem:[%s117 + $0x7e8] sm:$0xff]
        %v392 = vld [vmem:[%s117 + $0x7f0] sm:$0xff]
        %v393 = vld [vmem:[%s117 + $0x7f8] sm:$0xff]
        %v394 = vmax.f32 %v138, 0.0
        %v395 = vmax.f32 %v139, 0.0
        %v396 = vmax.f32 %v140, 0.0
        %v397 = vmax.f32 %v141, 0.0
        %v398 = vmax.f32 %v142, 0.0
        %v399 = vmax.f32 %v143, 0.0
        %v400 = vmax.f32 %v144, 0.0
        %v401 = vmax.f32 %v145, 0.0
        %v402 = vmax.f32 %v146, 0.0
        %v403 = vmax.f32 %v147, 0.0
        %v404 = vmax.f32 %v148, 0.0
        %v405 = vmax.f32 %v149, 0.0
        %v406 = vmax.f32 %v150, 0.0
        %v407 = vmax.f32 %v151, 0.0
        %v408 = vmax.f32 %v152, 0.0
        %v409 = vmax.f32 %v153, 0.0
        %v410 = vmax.f32 %v154, 0.0
        %v411 = vmax.f32 %v155, 0.0
        %v412 = vmax.f32 %v156, 0.0
        %v413 = vmax.f32 %v157, 0.0
        %v414 = vmax.f32 %v158, 0.0
        %v415 = vmax.f32 %v159, 0.0
        %v416 = vmax.f32 %v160, 0.0
        %v417 = vmax.f32 %v161, 0.0
        %v418 = vmax.f32 %v162, 0.0
        %v419 = vmax.f32 %v163, 0.0
        %v420 = vmax.f32 %v164, 0.0
        %v421 = vmax.f32 %v165, 0.0
        %v422 = vmax.f32 %v166, 0.0
        %v423 = vmax.f32 %v167, 0.0
        %v424 = vmax.f32 %v168, 0.0
        %v425 = vmax.f32 %v169, 0.0
        %v426 = vmax.f32 %v170, 0.0
        %v427 = vmax.f32 %v171, 0.0
        %v428 = vmax.f32 %v172, 0.0
        %v429 = vmax.f32 %v173, 0.0
        %v430 = vmax.f32 %v174, 0.0
        %v431 = vmax.f32 %v175, 0.0
        %v432 = vmax.f32 %v176, 0.0
        %v433 = vmax.f32 %v177, 0.0
        %v434 = vmax.f32 %v178, 0.0
        %v435 = vmax.f32 %v179, 0.0
        %v436 = vmax.f32 %v180, 0.0
        %v437 = vmax.f32 %v181, 0.0
        %v438 = vmax.f32 %v182, 0.0
        %v439 = vmax.f32 %v183, 0.0
        %v440 = vmax.f32 %v184, 0.0
        %v441 = vmax.f32 %v185, 0.0
        %v442 = vmax.f32 %v186, 0.0
        %v443 = vmax.f32 %v187, 0.0
        %v444 = vmax.f32 %v188, 0.0
        %v445 = vmax.f32 %v189, 0.0
        %v446 = vmax.f32 %v190, 0.0
        %v447 = vmax.f32 %v191, 0.0
        %v448 = vmax.f32 %v192, 0.0
        %v449 = vmax.f32 %v193, 0.0
        %v450 = vmax.f32 %v194, 0.0
        %v451 = vmax.f32 %v195, 0.0
        %v452 = vmax.f32 %v196, 0.0
        %v453 = vmax.f32 %v197, 0.0
        %v454 = vmax.f32 %v198, 0.0
        %v455 = vmax.f32 %v199, 0.0
        %v456 = vmax.f32 %v200, 0.0
        %v457 = vmax.f32 %v201, 0.0
        %v458 = vmax.f32 %v202, 0.0
        %v459 = vmax.f32 %v203, 0.0
        %v460 = vmax.f32 %v204, 0.0
        %v461 = vmax.f32 %v205, 0.0
        %v462 = vmax.f32 %v206, 0.0
        %v463 = vmax.f32 %v207, 0.0
        %v464 = vmax.f32 %v208, 0.0
        %v465 = vmax.f32 %v209, 0.0
        %v466 = vmax.f32 %v210, 0.0
        %v467 = vmax.f32 %v211, 0.0
        %v468 = vmax.f32 %v212, 0.0
        %v469 = vmax.f32 %v213, 0.0
        %v470 = vmax.f32 %v214, 0.0
        %v471 = vmax.f32 %v215, 0.0
        %v472 = vmax.f32 %v216, 0.0
        %v473 = vmax.f32 %v217, 0.0
        %v474 = vmax.f32 %v218, 0.0
        %v475 = vmax.f32 %v219, 0.0
        %v476 = vmax.f32 %v220, 0.0
        %v477 = vmax.f32 %v221, 0.0
        %v478 = vmax.f32 %v222, 0.0
        %v479 = vmax.f32 %v223, 0.0
        %v480 = vmax.f32 %v224, 0.0
        %v481 = vmax.f32 %v225, 0.0
        %v482 = vmax.f32 %v226, 0.0
        %v483 = vmax.f32 %v227, 0.0
        %v484 = vmax.f32 %v228, 0.0
        %v485 = vmax.f32 %v229, 0.0
        %v486 = vmax.f32 %v230, 0.0
        %v487 = vmax.f32 %v231, 0.0
        %v488 = vmax.f32 %v232, 0.0
        %v489 = vmax.f32 %v233, 0.0
        %v490 = vmax.f32 %v234, 0.0
        %v491 = vmax.f32 %v235, 0.0
        %v492 = vmax.f32 %v236, 0.0
        %v493 = vmax.f32 %v237, 0.0
        %v494 = vmax.f32 %v238, 0.0
        %v495 = vmax.f32 %v239, 0.0
        %v496 = vmax.f32 %v240, 0.0
        %v497 = vmax.f32 %v241, 0.0
        %v498 = vmax.f32 %v242, 0.0
        %v499 = vmax.f32 %v243, 0.0
        %v500 = vmax.f32 %v244, 0.0
        %v501 = vmax.f32 %v245, 0.0
        %v502 = vmax.f32 %v246, 0.0
        %v503 = vmax.f32 %v247, 0.0
        %v504 = vmax.f32 %v248, 0.0
        %v505 = vmax.f32 %v249, 0.0
        %v506 = vmax.f32 %v250, 0.0
        %v507 = vmax.f32 %v251, 0.0
        %v508 = vmax.f32 %v252, 0.0
        %v509 = vmax.f32 %v253, 0.0
        %v510 = vmax.f32 %v254, 0.0
        %v511 = vmax.f32 %v255, 0.0
        %v512 = vmax.f32 %v256, 0.0
        %v513 = vmax.f32 %v257, 0.0
        %v514 = vmax.f32 %v258, 0.0
        %v515 = vmax.f32 %v259, 0.0
        %v516 = vmax.f32 %v260, 0.0
        %v517 = vmax.f32 %v261, 0.0
        %v518 = vmax.f32 %v262, 0.0
        %v519 = vmax.f32 %v263, 0.0
        %v520 = vmax.f32 %v264, 0.0
        %v521 = vmax.f32 %v265, 0.0
        %v522 = vmax.f32 %v266, 0.0
        %v523 = vmax.f32 %v267, 0.0
        %v524 = vmax.f32 %v268, 0.0
        %v525 = vmax.f32 %v269, 0.0
        %v526 = vmax.f32 %v270, 0.0
        %v527 = vmax.f32 %v271, 0.0
        %v528 = vmax.f32 %v272, 0.0
        %v529 = vmax.f32 %v273, 0.0
        %v530 = vmax.f32 %v274, 0.0
        %v531 = vmax.f32 %v275, 0.0
        %v532 = vmax.f32 %v276, 0.0
        %v533 = vmax.f32 %v277, 0.0
        %v534 = vmax.f32 %v278, 0.0
        %v535 = vmax.f32 %v279, 0.0
        %v536 = vmax.f32 %v280, 0.0
        %v537 = vmax.f32 %v281, 0.0
        %v538 = vmax.f32 %v282, 0.0
        %v539 = vmax.f32 %v283, 0.0
        %v540 = vmax.f32 %v284, 0.0
        %v541 = vmax.f32 %v285, 0.0
        %v542 = vmax.f32 %v286, 0.0
        %v543 = vmax.f32 %v287, 0.0
        %v544 = vmax.f32 %v288, 0.0
        %v545 = vmax.f32 %v289, 0.0
        %v546 = vmax.f32 %v290, 0.0
        %v547 = vmax.f32 %v291, 0.0
        %v548 = vmax.f32 %v292, 0.0
        %v549 = vmax.f32 %v293, 0.0
        %v550 = vmax.f32 %v294, 0.0
        %v551 = vmax.f32 %v295, 0.0
        %v552 = vmax.f32 %v296, 0.0
        %v553 = vmax.f32 %v297, 0.0
        %v554 = vmax.f32 %v298, 0.0
        %v555 = vmax.f32 %v299, 0.0
        %v556 = vmax.f32 %v300, 0.0
        %v557 = vmax.f32 %v301, 0.0
        %v558 = vmax.f32 %v302, 0.0
        %v559 = vmax.f32 %v303, 0.0
        %v560 = vmax.f32 %v304, 0.0
        %v561 = vmax.f32 %v305, 0.0
        %v562 = vmax.f32 %v306, 0.0
        %v563 = vmax.f32 %v307, 0.0
        %v564 = vmax.f32 %v308, 0.0
        %v565 = vmax.f32 %v309, 0.0
        %v566 = vmax.f32 %v310, 0.0
        %v567 = vmax.f32 %v311, 0.0
        %v568 = vmax.f32 %v312, 0.0
        %v569 = vmax.f32 %v313, 0.0
        %v570 = vmax.f32 %v314, 0.0
        %v571 = vmax.f32 %v315, 0.0
        %v572 = vmax.f32 %v316, 0.0
        %v573 = vmax.f32 %v317, 0.0
        %v574 = vmax.f32 %v318, 0.0
        %v575 = vmax.f32 %v319, 0.0
        %v576 = vmax.f32 %v320, 0.0
        %v577 = vmax.f32 %v321, 0.0
        %v578 = vmax.f32 %v322, 0.0
        %v579 = vmax.f32 %v323, 0.0
        %v580 = vmax.f32 %v324, 0.0
        %v581 = vmax.f32 %v325, 0.0
        %v582 = vmax.f32 %v326, 0.0
        %v583 = vmax.f32 %v327, 0.0
        %v584 = vmax.f32 %v328, 0.0
        %v585 = vmax.f32 %v329, 0.0
        %v586 = vmax.f32 %v330, 0.0
        %v587 = vmax.f32 %v331, 0.0
        %v588 = vmax.f32 %v332, 0.0
        %v589 = vmax.f32 %v333, 0.0
        %v590 = vmax.f32 %v334, 0.0
        %v591 = vmax.f32 %v335, 0.0
        %v592 = vmax.f32 %v336, 0.0
        %v593 = vmax.f32 %v337, 0.0
        %v594 = vmax.f32 %v338, 0.0
        %v595 = vmax.f32 %v339, 0.0
        %v596 = vmax.f32 %v340, 0.0
        %v597 = vmax.f32 %v341, 0.0
        %v598 = vmax.f32 %v342, 0.0
        %v599 = vmax.f32 %v343, 0.0
        %v600 = vmax.f32 %v344, 0.0
        %v601 = vmax.f32 %v345, 0.0
        %v602 = vmax.f32 %v346, 0.0
        %v603 = vmax.f32 %v347, 0.0
        %v604 = vmax.f32 %v348, 0.0
        %v605 = vmax.f32 %v349, 0.0
        %v606 = vmax.f32 %v350, 0.0
        %v607 = vmax.f32 %v351, 0.0
        %v608 = vmax.f32 %v352, 0.0
        %v609 = vmax.f32 %v353, 0.0
        %v610 = vmax.f32 %v354, 0.0
        %v611 = vmax.f32 %v355, 0.0
        %v612 = vmax.f32 %v356, 0.0
        %v613 = vmax.f32 %v357, 0.0
        %v614 = vmax.f32 %v358, 0.0
        %v615 = vmax.f32 %v359, 0.0
        %v616 = vmax.f32 %v360, 0.0
        %v617 = vmax.f32 %v361, 0.0
        %v618 = vmax.f32 %v362, 0.0
        %v619 = vmax.f32 %v363, 0.0
        %v620 = vmax.f32 %v364, 0.0
        %v621 = vmax.f32 %v365, 0.0
        %v622 = vmax.f32 %v366, 0.0
        %v623 = vmax.f32 %v367, 0.0
        %v624 = vmax.f32 %v368, 0.0
        %v625 = vmax.f32 %v369, 0.0
        %v626 = vmax.f32 %v370, 0.0
        %v627 = vmax.f32 %v371, 0.0
        %v628 = vmax.f32 %v372, 0.0
        %v629 = vmax.f32 %v373, 0.0
        %v630 = vmax.f32 %v374, 0.0
        %v631 = vmax.f32 %v375, 0.0
        %v632 = vmax.f32 %v376, 0.0
        %v633 = vmax.f32 %v377, 0.0
        %v634 = vmax.f32 %v378, 0.0
        %v635 = vmax.f32 %v379, 0.0
        %v636 = vmax.f32 %v380, 0.0
        %v637 = vmax.f32 %v381, 0.0
        %v638 = vmax.f32 %v382, 0.0
        %v639 = vmax.f32 %v383, 0.0
        %v640 = vmax.f32 %v384, 0.0
        %v641 = vmax.f32 %v385, 0.0
        %v642 = vmax.f32 %v386, 0.0
        %v643 = vmax.f32 %v387, 0.0
        %v644 = vmax.f32 %v388, 0.0
        %v645 = vmax.f32 %v389, 0.0
        %v646 = vmax.f32 %v390, 0.0
        %v647 = vmax.f32 %v391, 0.0
        %v648 = vmax.f32 %v392, 0.0
        %v649 = vmax.f32 %v393, 0.0
        %650 = vst [vmem:[%s135] sm:$0xff] %v394
        %651 = vst [vmem:[%s135 + $0x8] sm:$0xff] %v395
        %652 = vst [vmem:[%s135 + $0x10] sm:$0xff] %v396
        %653 = vst [vmem:[%s135 + $0x18] sm:$0xff] %v397
        %654 = vst [vmem:[%s135 + $0x20] sm:$0xff] %v398
        %655 = vst [vmem:[%s135 + $0x28] sm:$0xff] %v399
        %656 = vst [vmem:[%s135 + $0x30] sm:$0xff] %v400
        %657 = vst [vmem:[%s135 + $0x38] sm:$0xff] %v401
        %658 = vst [vmem:[%s135 + $0x40] sm:$0xff] %v402
        %659 = vst [vmem:[%s135 + $0x48] sm:$0xff] %v403
        %660 = vst [vmem:[%s135 + $0x50] sm:$0xff] %v404
        %661 = vst [vmem:[%s135 + $0x58] sm:$0xff] %v405
        %662 = vst [vmem:[%s135 + $0x60] sm:$0xff] %v406
        %663 = vst [vmem:[%s135 + $0x68] sm:$0xff] %v407
        %664 = vst [vmem:[%s135 + $0x70] sm:$0xff] %v408
        %665 = vst [vmem:[%s135 + $0x78] sm:$0xff] %v409
        %666 = vst [vmem:[%s135 + $0x80] sm:$0xff] %v410
        %667 = vst [vmem:[%s135 + $0x88] sm:$0xff] %v411
        %668 = vst [vmem:[%s135 + $0x90] sm:$0xff] %v412
        %669 = vst [vmem:[%s135 + $0x98] sm:$0xff] %v413
        %670 = vst [vmem:[%s135 + $0xa0] sm:$0xff] %v414
        %671 = vst [vmem:[%s135 + $0xa8] sm:$0xff] %v415
        %672 = vst [vmem:[%s135 + $0xb0] sm:$0xff] %v416
        %673 = vst [vmem:[%s135 + $0xb8] sm:$0xff] %v417
        %674 = vst [vmem:[%s135 + $0xc0] sm:$0xff] %v418
        %675 = vst [vmem:[%s135 + $0xc8] sm:$0xff] %v419
        %676 = vst [vmem:[%s135 + $0xd0] sm:$0xff] %v420
        %677 = vst [vmem:[%s135 + $0xd8] sm:$0xff] %v421
        %678 = vst [vmem:[%s135 + $0xe0] sm:$0xff] %v422
        %679 = vst [vmem:[%s135 + $0xe8] sm:$0xff] %v423
        %680 = vst [vmem:[%s135 + $0xf0] sm:$0xff] %v424
        %681 = vst [vmem:[%s135 + $0xf8] sm:$0xff] %v425
        %682 = vst [vmem:[%s135 + $0x100] sm:$0xff] %v426
        %683 = vst [vmem:[%s135 + $0x108] sm:$0xff] %v427
        %684 = vst [vmem:[%s135 + $0x110] sm:$0xff] %v428
        %685 = vst [vmem:[%s135 + $0x118] sm:$0xff] %v429
        %686 = vst [vmem:[%s135 + $0x120] sm:$0xff] %v430
        %687 = vst [vmem:[%s135 + $0x128] sm:$0xff] %v431
        %688 = vst [vmem:[%s135 + $0x130] sm:$0xff] %v432
        %689 = vst [vmem:[%s135 + $0x138] sm:$0xff] %v433
        %690 = vst [vmem:[%s135 + $0x140] sm:$0xff] %v434
        %691 = vst [vmem:[%s135 + $0x148] sm:$0xff] %v435
        %692 = vst [vmem:[%s135 + $0x150] sm:$0xff] %v436
        %693 = vst [vmem:[%s135 + $0x158] sm:$0xff] %v437
        %694 = vst [vmem:[%s135 + $0x160] sm:$0xff] %v438
        %695 = vst [vmem:[%s135 + $0x168] sm:$0xff] %v439
        %696 = vst [vmem:[%s135 + $0x170] sm:$0xff] %v440
        %697 = vst [vmem:[%s135 + $0x178] sm:$0xff] %v441
        %698 = vst [vmem:[%s135 + $0x180] sm:$0xff] %v442
        %699 = vst [vmem:[%s135 + $0x188] sm:$0xff] %v443
        %700 = vst [vmem:[%s135 + $0x190] sm:$0xff] %v444
        %701 = vst [vmem:[%s135 + $0x198] sm:$0xff] %v445
        %702 = vst [vmem:[%s135 + $0x1a0] sm:$0xff] %v446
        %703 = vst [vmem:[%s135 + $0x1a8] sm:$0xff] %v447
        %704 = vst [vmem:[%s135 + $0x1b0] sm:$0xff] %v448
        %705 = vst [vmem:[%s135 + $0x1b8] sm:$0xff] %v449
        %706 = vst [vmem:[%s135 + $0x1c0] sm:$0xff] %v450
        %707 = vst [vmem:[%s135 + $0x1c8] sm:$0xff] %v451
        %708 = vst [vmem:[%s135 + $0x1d0] sm:$0xff] %v452
        %709 = vst [vmem:[%s135 + $0x1d8] sm:$0xff] %v453
        %710 = vst [vmem:[%s135 + $0x1e0] sm:$0xff] %v454
        %711 = vst [vmem:[%s135 + $0x1e8] sm:$0xff] %v455
        %712 = vst [vmem:[%s135 + $0x1f0] sm:$0xff] %v456
        %713 = vst [vmem:[%s135 + $0x1f8] sm:$0xff] %v457
        %714 = vst [vmem:[%s135 + $0x200] sm:$0xff] %v458
        %715 = vst [vmem:[%s135 + $0x208] sm:$0xff] %v459
        %716 = vst [vmem:[%s135 + $0x210] sm:$0xff] %v460
        %717 = vst [vmem:[%s135 + $0x218] sm:$0xff] %v461
        %718 = vst [vmem:[%s135 + $0x220] sm:$0xff] %v462
        %719 = vst [vmem:[%s135 + $0x228] sm:$0xff] %v463
        %720 = vst [vmem:[%s135 + $0x230] sm:$0xff] %v464
        %721 = vst [vmem:[%s135 + $0x238] sm:$0xff] %v465
        %722 = vst [vmem:[%s135 + $0x240] sm:$0xff] %v466
        %723 = vst [vmem:[%s135 + $0x248] sm:$0xff] %v467
        %724 = vst [vmem:[%s135 + $0x250] sm:$0xff] %v468
        %725 = vst [vmem:[%s135 + $0x258] sm:$0xff] %v469
        %726 = vst [vmem:[%s135 + $0x260] sm:$0xff] %v470
        %727 = vst [vmem:[%s135 + $0x268] sm:$0xff] %v471
        %728 = vst [vmem:[%s135 + $0x270] sm:$0xff] %v472
        %729 = vst [vmem:[%s135 + $0x278] sm:$0xff] %v473
        %730 = vst [vmem:[%s135 + $0x280] sm:$0xff] %v474
        %731 = vst [vmem:[%s135 + $0x288] sm:$0xff] %v475
        %732 = vst [vmem:[%s135 + $0x290] sm:$0xff] %v476
        %733 = vst [vmem:[%s135 + $0x298] sm:$0xff] %v477
        %734 = vst [vmem:[%s135 + $0x2a0] sm:$0xff] %v478
        %735 = vst [vmem:[%s135 + $0x2a8] sm:$0xff] %v479
        %736 = vst [vmem:[%s135 + $0x2b0] sm:$0xff] %v480
        %737 = vst [vmem:[%s135 + $0x2b8] sm:$0xff] %v481
        %738 = vst [vmem:[%s135 + $0x2c0] sm:$0xff] %v482
        %739 = vst [vmem:[%s135 + $0x2c8] sm:$0xff] %v483
        %740 = vst [vmem:[%s135 + $0x2d0] sm:$0xff] %v484
        %741 = vst [vmem:[%s135 + $0x2d8] sm:$0xff] %v485
        %742 = vst [vmem:[%s135 + $0x2e0] sm:$0xff] %v486
        %743 = vst [vmem:[%s135 + $0x2e8] sm:$0xff] %v487
        %744 = vst [vmem:[%s135 + $0x2f0] sm:$0xff] %v488
        %745 = vst [vmem:[%s135 + $0x2f8] sm:$0xff] %v489
        %746 = vst [vmem:[%s135 + $0x300] sm:$0xff] %v490
        %747 = vst [vmem:[%s135 + $0x308] sm:$0xff] %v491
        %748 = vst [vmem:[%s135 + $0x310] sm:$0xff] %v492
        %749 = vst [vmem:[%s135 + $0x318] sm:$0xff] %v493
        %750 = vst [vmem:[%s135 + $0x320] sm:$0xff] %v494
        %751 = vst [vmem:[%s135 + $0x328] sm:$0xff] %v495
        %752 = vst [vmem:[%s135 + $0x330] sm:$0xff] %v496
        %753 = vst [vmem:[%s135 + $0x338] sm:$0xff] %v497
        %754 = vst [vmem:[%s135 + $0x340] sm:$0xff] %v498
        %755 = vst [vmem:[%s135 + $0x348] sm:$0xff] %v499
        %756 = vst [vmem:[%s135 + $0x350] sm:$0xff] %v500
        %757 = vst [vmem:[%s135 + $0x358] sm:$0xff] %v501
        %758 = vst [vmem:[%s135 + $0x360] sm:$0xff] %v502
        %759 = vst [vmem:[%s135 + $0x368] sm:$0xff] %v503
        %760 = vst [vmem:[%s135 + $0x370] sm:$0xff] %v504
        %761 = vst [vmem:[%s135 + $0x378] sm:$0xff] %v505
        %762 = vst [vmem:[%s135 + $0x380] sm:$0xff] %v506
        %763 = vst [vmem:[%s135 + $0x388] sm:$0xff] %v507
        %764 = vst [vmem:[%s135 + $0x390] sm:$0xff] %v508
        %765 = vst [vmem:[%s135 + $0x398] sm:$0xff] %v509
        %766 = vst [vmem:[%s135 + $0x3a0] sm:$0xff] %v510
        %767 = vst [vmem:[%s135 + $0x3a8] sm:$0xff] %v511
        %768 = vst [vmem:[%s135 + $0x3b0] sm:$0xff] %v512
        %769 = vst [vmem:[%s135 + $0x3b8] sm:$0xff] %v513
        %770 = vst [vmem:[%s135 + $0x3c0] sm:$0xff] %v514
        %771 = vst [vmem:[%s135 + $0x3c8] sm:$0xff] %v515
        %772 = vst [vmem:[%s135 + $0x3d0] sm:$0xff] %v516
        %773 = vst [vmem:[%s135 + $0x3d8] sm:$0xff] %v517
        %774 = vst [vmem:[%s135 + $0x3e0] sm:$0xff] %v518
        %775 = vst [vmem:[%s135 + $0x3e8] sm:$0xff] %v519
        %776 = vst [vmem:[%s135 + $0x3f0] sm:$0xff] %v520
        %777 = vst [vmem:[%s135 + $0x3f8] sm:$0xff] %v521
        %778 = vst [vmem:[%s135 + $0x400] sm:$0xff] %v522
        %779 = vst [vmem:[%s135 + $0x408] sm:$0xff] %v523
        %780 = vst [vmem:[%s135 + $0x410] sm:$0xff] %v524
        %781 = vst [vmem:[%s135 + $0x418] sm:$0xff] %v525
        %782 = vst [vmem:[%s135 + $0x420] sm:$0xff] %v526
        %783 = vst [vmem:[%s135 + $0x428] sm:$0xff] %v527
        %784 = vst [vmem:[%s135 + $0x430] sm:$0xff] %v528
        %785 = vst [vmem:[%s135 + $0x438] sm:$0xff] %v529
        %786 = vst [vmem:[%s135 + $0x440] sm:$0xff] %v530
        %787 = vst [vmem:[%s135 + $0x448] sm:$0xff] %v531
        %788 = vst [vmem:[%s135 + $0x450] sm:$0xff] %v532
        %789 = vst [vmem:[%s135 + $0x458] sm:$0xff] %v533
        %790 = vst [vmem:[%s135 + $0x460] sm:$0xff] %v534
        %791 = vst [vmem:[%s135 + $0x468] sm:$0xff] %v535
        %792 = vst [vmem:[%s135 + $0x470] sm:$0xff] %v536
        %793 = vst [vmem:[%s135 + $0x478] sm:$0xff] %v537
        %794 = vst [vmem:[%s135 + $0x480] sm:$0xff] %v538
        %795 = vst [vmem:[%s135 + $0x488] sm:$0xff] %v539
        %796 = vst [vmem:[%s135 + $0x490] sm:$0xff] %v540
        %797 = vst [vmem:[%s135 + $0x498] sm:$0xff] %v541
        %798 = vst [vmem:[%s135 + $0x4a0] sm:$0xff] %v542
        %799 = vst [vmem:[%s135 + $0x4a8] sm:$0xff] %v543
        %800 = vst [vmem:[%s135 + $0x4b0] sm:$0xff] %v544
        %801 = vst [vmem:[%s135 + $0x4b8] sm:$0xff] %v545
        %802 = vst [vmem:[%s135 + $0x4c0] sm:$0xff] %v546
        %803 = vst [vmem:[%s135 + $0x4c8] sm:$0xff] %v547
        %804 = vst [vmem:[%s135 + $0x4d0] sm:$0xff] %v548
        %805 = vst [vmem:[%s135 + $0x4d8] sm:$0xff] %v549
        %806 = vst [vmem:[%s135 + $0x4e0] sm:$0xff] %v550
        %807 = vst [vmem:[%s135 + $0x4e8] sm:$0xff] %v551
        %808 = vst [vmem:[%s135 + $0x4f0] sm:$0xff] %v552
        %809 = vst [vmem:[%s135 + $0x4f8] sm:$0xff] %v553
        %810 = vst [vmem:[%s135 + $0x500] sm:$0xff] %v554
        %811 = vst [vmem:[%s135 + $0x508] sm:$0xff] %v555
        %812 = vst [vmem:[%s135 + $0x510] sm:$0xff] %v556
        %813 = vst [vmem:[%s135 + $0x518] sm:$0xff] %v557
        %814 = vst [vmem:[%s135 + $0x520] sm:$0xff] %v558
        %815 = vst [vmem:[%s135 + $0x528] sm:$0xff] %v559
        %816 = vst [vmem:[%s135 + $0x530] sm:$0xff] %v560
        %817 = vst [vmem:[%s135 + $0x538] sm:$0xff] %v561
        %818 = vst [vmem:[%s135 + $0x540] sm:$0xff] %v562
        %819 = vst [vmem:[%s135 + $0x548] sm:$0xff] %v563
        %820 = vst [vmem:[%s135 + $0x550] sm:$0xff] %v564
        %821 = vst [vmem:[%s135 + $0x558] sm:$0xff] %v565
        %822 = vst [vmem:[%s135 + $0x560] sm:$0xff] %v566
        %823 = vst [vmem:[%s135 + $0x568] sm:$0xff] %v567
        %824 = vst [vmem:[%s135 + $0x570] sm:$0xff] %v568
        %825 = vst [vmem:[%s135 + $0x578] sm:$0xff] %v569
        %826 = vst [vmem:[%s135 + $0x580] sm:$0xff] %v570
        %827 = vst [vmem:[%s135 + $0x588] sm:$0xff] %v571
        %828 = vst [vmem:[%s135 + $0x590] sm:$0xff] %v572
        %829 = vst [vmem:[%s135 + $0x598] sm:$0xff] %v573
        %830 = vst [vmem:[%s135 + $0x5a0] sm:$0xff] %v574
        %831 = vst [vmem:[%s135 + $0x5a8] sm:$0xff] %v575
        %832 = vst [vmem:[%s135 + $0x5b0] sm:$0xff] %v576
        %833 = vst [vmem:[%s135 + $0x5b8] sm:$0xff] %v577
        %834 = vst [vmem:[%s135 + $0x5c0] sm:$0xff] %v578
        %835 = vst [vmem:[%s135 + $0x5c8] sm:$0xff] %v579
        %836 = vst [vmem:[%s135 + $0x5d0] sm:$0xff] %v580
        %837 = vst [vmem:[%s135 + $0x5d8] sm:$0xff] %v581
        %838 = vst [vmem:[%s135 + $0x5e0] sm:$0xff] %v582
        %839 = vst [vmem:[%s135 + $0x5e8] sm:$0xff] %v583
        %840 = vst [vmem:[%s135 + $0x5f0] sm:$0xff] %v584
        %841 = vst [vmem:[%s135 + $0x5f8] sm:$0xff] %v585
        %842 = vst [vmem:[%s135 + $0x600] sm:$0xff] %v586
        %843 = vst [vmem:[%s135 + $0x608] sm:$0xff] %v587
        %844 = vst [vmem:[%s135 + $0x610] sm:$0xff] %v588
        %845 = vst [vmem:[%s135 + $0x618] sm:$0xff] %v589
        %846 = vst [vmem:[%s135 + $0x620] sm:$0xff] %v590
        %847 = vst [vmem:[%s135 + $0x628] sm:$0xff] %v591
        %848 = vst [vmem:[%s135 + $0x630] sm:$0xff] %v592
        %849 = vst [vmem:[%s135 + $0x638] sm:$0xff] %v593
        %850 = vst [vmem:[%s135 + $0x640] sm:$0xff] %v594
        %851 = vst [vmem:[%s135 + $0x648] sm:$0xff] %v595
        %852 = vst [vmem:[%s135 + $0x650] sm:$0xff] %v596
        %853 = vst [vmem:[%s135 + $0x658] sm:$0xff] %v597
        %854 = vst [vmem:[%s135 + $0x660] sm:$0xff] %v598
        %855 = vst [vmem:[%s135 + $0x668] sm:$0xff] %v599
        %856 = vst [vmem:[%s135 + $0x670] sm:$0xff] %v600
        %857 = vst [vmem:[%s135 + $0x678] sm:$0xff] %v601
        %858 = vst [vmem:[%s135 + $0x680] sm:$0xff] %v602
        %859 = vst [vmem:[%s135 + $0x688] sm:$0xff] %v603
        %860 = vst [vmem:[%s135 + $0x690] sm:$0xff] %v604
        %861 = vst [vmem:[%s135 + $0x698] sm:$0xff] %v605
        %862 = vst [vmem:[%s135 + $0x6a0] sm:$0xff] %v606
        %863 = vst [vmem:[%s135 + $0x6a8] sm:$0xff] %v607
        %864 = vst [vmem:[%s135 + $0x6b0] sm:$0xff] %v608
        %865 = vst [vmem:[%s135 + $0x6b8] sm:$0xff] %v609
        %866 = vst [vmem:[%s135 + $0x6c0] sm:$0xff] %v610
        %867 = vst [vmem:[%s135 + $0x6c8] sm:$0xff] %v611
        %868 = vst [vmem:[%s135 + $0x6d0] sm:$0xff] %v612
        %869 = vst [vmem:[%s135 + $0x6d8] sm:$0xff] %v613
        %870 = vst [vmem:[%s135 + $0x6e0] sm:$0xff] %v614
        %871 = vst [vmem:[%s135 + $0x6e8] sm:$0xff] %v615
        %872 = vst [vmem:[%s135 + $0x6f0] sm:$0xff] %v616
        %873 = vst [vmem:[%s135 + $0x6f8] sm:$0xff] %v617
        %874 = vst [vmem:[%s135 + $0x700] sm:$0xff] %v618
        %875 = vst [vmem:[%s135 + $0x708] sm:$0xff] %v619
        %876 = vst [vmem:[%s135 + $0x710] sm:$0xff] %v620
        %877 = vst [vmem:[%s135 + $0x718] sm:$0xff] %v621
        %878 = vst [vmem:[%s135 + $0x720] sm:$0xff] %v622
        %879 = vst [vmem:[%s135 + $0x728] sm:$0xff] %v623
        %880 = vst [vmem:[%s135 + $0x730] sm:$0xff] %v624
        %881 = vst [vmem:[%s135 + $0x738] sm:$0xff] %v625
        %882 = vst [vmem:[%s135 + $0x740] sm:$0xff] %v626
        %883 = vst [vmem:[%s135 + $0x748] sm:$0xff] %v627
        %884 = vst [vmem:[%s135 + $0x750] sm:$0xff] %v628
        %885 = vst [vmem:[%s135 + $0x758] sm:$0xff] %v629
        %886 = vst [vmem:[%s135 + $0x760] sm:$0xff] %v630
        %887 = vst [vmem:[%s135 + $0x768] sm:$0xff] %v631
        %888 = vst [vmem:[%s135 + $0x770] sm:$0xff] %v632
        %889 = vst [vmem:[%s135 + $0x778] sm:$0xff] %v633
        %890 = vst [vmem:[%s135 + $0x780] sm:$0xff] %v634
        %891 = vst [vmem:[%s135 + $0x788] sm:$0xff] %v635
        %892 = vst [vmem:[%s135 + $0x790] sm:$0xff] %v636
        %893 = vst [vmem:[%s135 + $0x798] sm:$0xff] %v637
        %894 = vst [vmem:[%s135 + $0x7a0] sm:$0xff] %v638
        %895 = vst [vmem:[%s135 + $0x7a8] sm:$0xff] %v639
        %896 = vst [vmem:[%s135 + $0x7b0] sm:$0xff] %v640
        %897 = vst [vmem:[%s135 + $0x7b8] sm:$0xff] %v641
        %898 = vst [vmem:[%s135 + $0x7c0] sm:$0xff] %v642
        %899 = vst [vmem:[%s135 + $0x7c8] sm:$0xff] %v643
        %900 = vst [vmem:[%s135 + $0x7d0] sm:$0xff] %v644
        %901 = vst [vmem:[%s135 + $0x7d8] sm:$0xff] %v645
        %902 = vst [vmem:[%s135 + $0x7e0] sm:$0xff] %v646
        %903 = vst [vmem:[%s135 + $0x7e8] sm:$0xff] %v647
        %904 = vst [vmem:[%s135 + $0x7f0] sm:$0xff] %v648
        %905 = vst [vmem:[%s135 + $0x7f8] sm:$0xff] %v649
        %s906 = sand.u32 %s52, 1
        %s907 = scalar_lea.sflag [#allocation4], %s906
        %s908 = sand.u32 %s52, 1
        %s909 = smul.addr %s908, 2048
        %s910 = scalar_lea.vmem [#allocation5], %s909
        // Predicated region
        $region29: #{tpu_custom_call.1} parent=23 // pred_check
          %p911 = pneg %p62
        $region30: #{tpu_custom_call.1} parent=23 // pred_check_branch
          %913 = sbr.rel (%p911) target = $region32
        $region31: #{tpu_custom_call.1} parent=23 // pred_region
          %s914 = smul.u32 16, %s18
          %s916 = ssub.s32 32768, 32768
          %917 = vsyncadd %s907, %s916
          %s918 = smul.addr %s914, 16
          %s919 = smul.addr %s918, 128
          %s920 = scalar_lea.hbm %s1, %s919
          %s921 = sshll.u32 %s910, 4
          %s922 = int_to_ptr.vmem [resolvable:$true] %s921
          %927 = dma.vmem_to_hbm [thread:$0]  %s922, 32768, %s920, %s907, 2048, 2048, 128
        $region32: #{tpu_custom_call.1} parent=23 // pred_fallthru
          _
      $region24: #{tpu_custom_call.1} parent=5 // pred_fallthru
        _
      %p928 = scmp.le.s32.totalorder 2, %s13
      // Predicated region
      $region33: #{tpu_custom_call.1} parent=5 // pred_check
        %p929 = pneg %p928
      $region34: #{tpu_custom_call.1} parent=5 // pred_check_branch
        %931 = sbr.rel (%p929) target = $region36
      $region35: #{tpu_custom_call.1} parent=5 // pred_region
        %s932 = ssub.s32 %s13, 2
        // Predicated region
        $region37: #{tpu_custom_call.1} parent=35 // pred_check
          %p933 = pneg %p68
        $region38: #{tpu_custom_call.1} parent=35 // pred_check_branch
          %935 = sbr.rel (%p933) target = $region40
        $region39: #{tpu_custom_call.1} parent=35 // pred_region
          %s936 = sand.u32 %s53, 1
          %s937 = scalar_lea.sflag [#allocation4], %s936
          %s938 = sand.u32 %s53, 1
          %s939 = smul.addr %s938, 2048
          %s940 = scalar_lea.vmem [#allocation5], %s939
          %941 = dma.done %s937, 32768
        $region40: #{tpu_custom_call.1} parent=35 // pred_fallthru
          _
      $region36: #{tpu_custom_call.1} parent=5 // pred_fallthru
        _
    $region6: #{tpu_custom_call.1} parent=1 // loop_footer
      %s17 = sadd.s32 1, %s13
    $region7: #{tpu_custom_call.1} parent=1 // loop_footer_branch
      %12 = sbr.rel target = $region3
    $region8: #{tpu_custom_call.1} parent=1 // loop_exit
      _
    %942 = vsyncpa [#allocation3], 1
    %s943 = scalar_lea.sflag [#allocation3], 1
    %944 = vsyncpa %s943, 1
    %945 = vsyncpa [#allocation4], 1
    %s946 = scalar_lea.sflag [#allocation4], 1
    %947 = vsyncpa %s946, 1

</llo_original>
